<compile_context>
chip_gen: v6e
topology: v6e:2x2x1
jax: 0.10.0
libtpu: 0.0.40
codegen_flags: <defaults>
</compile_context>

<pallas_src>
import functools

import jax
import jax.numpy as jnp
from jax.experimental import pallas as pl
from jax.experimental.pallas import tpu as pltpu


def _round_up(n: int, m: int) -> int:
    return ((n + m - 1) // m) * m


def _mamba_fused_kernel(n_layers, x_ref, w1_ref, b1_ref, w2_ref, b2_ref, o_ref):
    """Fused forward over all layers in one kernel invocation.

    x_ref : (Bp, Fp)        lane-dense input activations
    w1_ref: (L, Fp, Sp)     per-layer first linear weights  (in, out)
    b1_ref: (L, 1, Sp)      per-layer first linear biases
    w2_ref: (L, Sp, Fp)     per-layer second linear weights (in, out)
    b2_ref: (L, 1, Fp)      per-layer second linear biases
    o_ref : (Bp, Fp)        output, written once after the last layer
    """
    y = x_ref[...].astype(jnp.float32)
    # L is small and static -> Python-unrolled loop; full scheduler visibility.
    for l in range(n_layers):
        h = jnp.dot(y, w1_ref[l], preferred_element_type=jnp.float32) + b1_ref[l]
        h = h * jax.nn.sigmoid(h)  # SiLU in f32 (EUP sigmoid, VPU mul)
        y = jnp.dot(h, w2_ref[l], preferred_element_type=jnp.float32) + b2_ref[l]
    o_ref[...] = y.astype(o_ref.dtype)  # single lane-dense writeback


@functools.partial(jax.jit, static_argnames=())
def mamba_forward(x, w1, b1, w2, b2):
    """Run the full MAMBA stack.

    x : (B, F)
    w1: (L, F, S)   b1: (L, 1, S)
    w2: (L, S, F)   b2: (L, 1, F)
    where L = 2 * hidden_size (SelectiveSSM and the Sequential block compute the
    identical function, just with separate parameters).
    """
    B, F = x.shape
    L, _, S = w1.shape

    # Lane-dense padding: last dims to multiples of 128, batch to multiple of 8.
    Fp = _round_up(F, 128)
    Sp = _round_up(S, 128)
    Bp = _round_up(B, 8)

    f32 = jnp.float32
    xp = jnp.zeros((Bp, Fp), f32).at[:B, :F].set(x.astype(f32))
    w1p = jnp.zeros((L, Fp, Sp), f32).at[:, :F, :S].set(w1.astype(f32))
    b1p = jnp.zeros((L, 1, Sp), f32).at[:, :, :S].set(b1.astype(f32))
    w2p = jnp.zeros((L, Sp, Fp), f32).at[:, :S, :F].set(w2.astype(f32))
    b2p = jnp.zeros((L, 1, Fp), f32).at[:, :, :F].set(b2.astype(f32))

    vmem = pl.BlockSpec(memory_space=pltpu.MemorySpace.VMEM)
    out_padded = pl.pallas_call(
        functools.partial(_mamba_fused_kernel, L),
        out_shape=jax.ShapeDtypeStruct((Bp, Fp), f32),
        in_specs=[vmem, vmem, vmem, vmem, vmem],
        out_specs=vmem,
        compiler_params=pltpu.CompilerParams(vmem_limit_bytes=32 << 20),
    )(xp, w1p, b1p, w2p, b2p)

    return out_padded[:B, :F].astype(x.dtype)


def mamba_reference(x, w1, b1, w2, b2):
    """Plain-JAX reference of the same forward pass."""
    y = x.astype(jnp.float32)
    for l in range(w1.shape[0]):
        h = y @ w1[l] + b1[l]
        h = h * jax.nn.sigmoid(h)
        y = h @ w2[l] + b2[l]
    return y.astype(x.dtype)


if __name__ == "__main__":
    # Small, deterministic configuration consistent with MAMBA(__init__):
    #   n_features=32, state_dim=16, hidden_size=2 -> 2*hidden_size = 4 layers
    batch = 8
    n_features = 32
    state_dim = 16
    hidden_size = 2
    n_layers = 2 * hidden_size

    key = jax.random.PRNGKey(0)
    kx, kw1, kb1, kw2, kb2 = jax.random.split(key, 5)

    x = jax.random.normal(kx, (batch, n_features), dtype=jnp.float32)

    # Deterministic parameter init (PyTorch-Linear-like uniform scale).
    lim1 = 1.0 / (n_features ** 0.5)
    lim2 = 1.0 / (state_dim ** 0.5)
    w1 = jax.random.uniform(kw1, (n_layers, n_features, state_dim),
                            minval=-lim1, maxval=lim1, dtype=jnp.float32)
    b1 = jax.random.uniform(kb1, (n_layers, 1, state_dim),
                            minval=-lim1, maxval=lim1, dtype=jnp.float32)
    w2 = jax.random.uniform(kw2, (n_layers, state_dim, n_features),
                            minval=-lim2, maxval=lim2, dtype=jnp.float32)
    b2 = jax.random.uniform(kb2, (n_layers, 1, n_features),
                            minval=-lim2, maxval=lim2, dtype=jnp.float32)

    out = mamba_forward(x, w1, b1, w2, b2)
    out = jax.block_until_ready(out)

    ref = mamba_reference(x, w1, b1, w2, b2)
    assert out.shape == (batch, n_features)
    assert jnp.allclose(out, ref, atol=1e-5, rtol=1e-5), "Pallas kernel mismatch vs reference"

    print("KERNEL_OK")
</pallas_src>

<mosaic_0001>
module attributes {stable_mosaic.version = 11 : i64} {
  func.func @_mamba_fused_kernel(%arg0: memref<8x128xf32, #tpu.memory_space<vmem>>, %arg1: memref<4x128x128xf32, #tpu.memory_space<vmem>>, %arg2: memref<4x1x128xf32, #tpu.memory_space<vmem>>, %arg3: memref<4x128x128xf32, #tpu.memory_space<vmem>>, %arg4: memref<4x1x128xf32, #tpu.memory_space<vmem>>, %arg5: memref<8x128xf32, #tpu.memory_space<vmem>>) attributes {dimension_semantics = [], scalar_prefetch = 0 : i64, scratch_operands = 0 : i64, tpu.core_type = #tpu.core_type<tc>} {
    %c0 = arith.constant 0 : index
    %c0_0 = arith.constant 0 : index
    %0 = vector.load %arg0[%c0, %c0_0] : memref<8x128xf32, #tpu.memory_space<vmem>>, vector<8x128xf32>
    %c0_1 = arith.constant 0 : index
    %c0_2 = arith.constant 0 : index
    %c0_3 = arith.constant 0 : index
    %1 = vector.load %arg1[%c0_1, %c0_2, %c0_3] : memref<4x128x128xf32, #tpu.memory_space<vmem>>, vector<1x128x128xf32>
    %2 = vector.shape_cast %1 : vector<1x128x128xf32> to vector<128x128xf32>
    %cst = arith.constant dense<0.000000e+00> : vector<8x128xf32>
    %3 = tpu.matmul %0, %2, %cst {dimension_numbers = #tpu.dot_dimension_numbers<[1], [0], [0], [1], [0, 0, 1, 1], [], []>} : vector<8x128xf32>, vector<128x128xf32>, vector<8x128xf32> -> vector<8x128xf32>
    %c0_4 = arith.constant 0 : index
    %c0_5 = arith.constant 0 : index
    %c0_6 = arith.constant 0 : index
    %4 = vector.load %arg2[%c0_4, %c0_5, %c0_6] : memref<4x1x128xf32, #tpu.memory_space<vmem>>, vector<1x1x128xf32>
    %5 = vector.shape_cast %4 : vector<1x1x128xf32> to vector<1x128xf32>
    %6 = vector.broadcast %5 : vector<1x128xf32> to vector<8x128xf32>
    %7 = arith.addf %3, %6 : vector<8x128xf32>
    %8 = arith.negf %7 : vector<8x128xf32>
    %9 = math.exp %8 : vector<8x128xf32>
    %cst_7 = arith.constant 1.000000e+00 : f32
    %10 = vector.broadcast %cst_7 : f32 to vector<8x128xf32>
    %11 = arith.addf %10, %9 : vector<8x128xf32>
    %12 = arith.divf %10, %11 : vector<8x128xf32>
    %13 = arith.mulf %7, %12 : vector<8x128xf32>
    %c0_8 = arith.constant 0 : index
    %c0_9 = arith.constant 0 : index
    %c0_10 = arith.constant 0 : index
    %14 = vector.load %arg3[%c0_8, %c0_9, %c0_10] : memref<4x128x128xf32, #tpu.memory_space<vmem>>, vector<1x128x128xf32>
    %15 = vector.shape_cast %14 : vector<1x128x128xf32> to vector<128x128xf32>
    %cst_11 = arith.constant dense<0.000000e+00> : vector<8x128xf32>
    %16 = tpu.matmul %13, %15, %cst_11 {dimension_numbers = #tpu.dot_dimension_numbers<[1], [0], [0], [1], [0, 0, 1, 1], [], []>} : vector<8x128xf32>, vector<128x128xf32>, vector<8x128xf32> -> vector<8x128xf32>
    %c0_12 = arith.constant 0 : index
    %c0_13 = arith.constant 0 : index
    %c0_14 = arith.constant 0 : index
    %17 = vector.load %arg4[%c0_12, %c0_13, %c0_14] : memref<4x1x128xf32, #tpu.memory_space<vmem>>, vector<1x1x128xf32>
    %18 = vector.shape_cast %17 : vector<1x1x128xf32> to vector<1x128xf32>
    %19 = vector.broadcast %18 : vector<1x128xf32> to vector<8x128xf32>
    %20 = arith.addf %16, %19 : vector<8x128xf32>
    %c1 = arith.constant 1 : index
    %c0_15 = arith.constant 0 : index
    %c0_16 = arith.constant 0 : index
    %21 = vector.load %arg1[%c1, %c0_15, %c0_16] : memref<4x128x128xf32, #tpu.memory_space<vmem>>, vector<1x128x128xf32>
    %22 = vector.shape_cast %21 : vector<1x128x128xf32> to vector<128x128xf32>
    %cst_17 = arith.constant dense<0.000000e+00> : vector<8x128xf32>
    %23 = tpu.matmul %20, %22, %cst_17 {dimension_numbers = #tpu.dot_dimension_numbers<[1], [0], [0], [1], [0, 0, 1, 1], [], []>} : vector<8x128xf32>, vector<128x128xf32>, vector<8x128xf32> -> vector<8x128xf32>
    %c1_18 = arith.constant 1 : index
    %c0_19 = arith.constant 0 : index
    %c0_20 = arith.constant 0 : index
    %24 = vector.load %arg2[%c1_18, %c0_19, %c0_20] : memref<4x1x128xf32, #tpu.memory_space<vmem>>, vector<1x1x128xf32>
    %25 = vector.shape_cast %24 : vector<1x1x128xf32> to vector<1x128xf32>
    %26 = vector.broadcast %25 : vector<1x128xf32> to vector<8x128xf32>
    %27 = arith.addf %23, %26 : vector<8x128xf32>
    %28 = arith.negf %27 : vector<8x128xf32>
    %29 = math.exp %28 : vector<8x128xf32>
    %cst_21 = arith.constant 1.000000e+00 : f32
    %30 = vector.broadcast %cst_21 : f32 to vector<8x128xf32>
    %31 = arith.addf %30, %29 : vector<8x128xf32>
    %32 = arith.divf %30, %31 : vector<8x128xf32>
    %33 = arith.mulf %27, %32 : vector<8x128xf32>
    %c1_22 = arith.constant 1 : index
    %c0_23 = arith.constant 0 : index
    %c0_24 = arith.constant 0 : index
    %34 = vector.load %arg3[%c1_22, %c0_23, %c0_24] : memref<4x128x128xf32, #tpu.memory_space<vmem>>, vector<1x128x128xf32>
    %35 = vector.shape_cast %34 : vector<1x128x128xf32> to vector<128x128xf32>
    %cst_25 = arith.constant dense<0.000000e+00> : vector<8x128xf32>
    %36 = tpu.matmul %33, %35, %cst_25 {dimension_numbers = #tpu.dot_dimension_numbers<[1], [0], [0], [1], [0, 0, 1, 1], [], []>} : vector<8x128xf32>, vector<128x128xf32>, vector<8x128xf32> -> vector<8x128xf32>
    %c1_26 = arith.constant 1 : index
    %c0_27 = arith.constant 0 : index
    %c0_28 = arith.constant 0 : index
    %37 = vector.load %arg4[%c1_26, %c0_27, %c0_28] : memref<4x1x128xf32, #tpu.memory_space<vmem>>, vector<1x1x128xf32>
    %38 = vector.shape_cast %37 : vector<1x1x128xf32> to vector<1x128xf32>
    %39 = vector.broadcast %38 : vector<1x128xf32> to vector<8x128xf32>
    %40 = arith.addf %36, %39 : vector<8x128xf32>
    %c2 = arith.constant 2 : index
    %c0_29 = arith.constant 0 : index
    %c0_30 = arith.constant 0 : index
    %41 = vector.load %arg1[%c2, %c0_29, %c0_30] : memref<4x128x128xf32, #tpu.memory_space<vmem>>, vector<1x128x128xf32>
    %42 = vector.shape_cast %41 : vector<1x128x128xf32> to vector<128x128xf32>
    %cst_31 = arith.constant dense<0.000000e+00> : vector<8x128xf32>
    %43 = tpu.matmul %40, %42, %cst_31 {dimension_numbers = #tpu.dot_dimension_numbers<[1], [0], [0], [1], [0, 0, 1, 1], [], []>} : vector<8x128xf32>, vector<128x128xf32>, vector<8x128xf32> -> vector<8x128xf32>
    %c2_32 = arith.constant 2 : index
    %c0_33 = arith.constant 0 : index
    %c0_34 = arith.constant 0 : index
    %44 = vector.load %arg2[%c2_32, %c0_33, %c0_34] : memref<4x1x128xf32, #tpu.memory_space<vmem>>, vector<1x1x128xf32>
    %45 = vector.shape_cast %44 : vector<1x1x128xf32> to vector<1x128xf32>
    %46 = vector.broadcast %45 : vector<1x128xf32> to vector<8x128xf32>
    %47 = arith.addf %43, %46 : vector<8x128xf32>
    %48 = arith.negf %47 : vector<8x128xf32>
    %49 = math.exp %48 : vector<8x128xf32>
    %cst_35 = arith.constant 1.000000e+00 : f32
    %50 = vector.broadcast %cst_35 : f32 to vector<8x128xf32>
    %51 = arith.addf %50, %49 : vector<8x128xf32>
    %52 = arith.divf %50, %51 : vector<8x128xf32>
    %53 = arith.mulf %47, %52 : vector<8x128xf32>
    %c2_36 = arith.constant 2 : index
    %c0_37 = arith.constant 0 : index
    %c0_38 = arith.constant 0 : index
    %54 = vector.load %arg3[%c2_36, %c0_37, %c0_38] : memref<4x128x128xf32, #tpu.memory_space<vmem>>, vector<1x128x128xf32>
    %55 = vector.shape_cast %54 : vector<1x128x128xf32> to vector<128x128xf32>
    %cst_39 = arith.constant dense<0.000000e+00> : vector<8x128xf32>
    %56 = tpu.matmul %53, %55, %cst_39 {dimension_numbers = #tpu.dot_dimension_numbers<[1], [0], [0], [1], [0, 0, 1, 1], [], []>} : vector<8x128xf32>, vector<128x128xf32>, vector<8x128xf32> -> vector<8x128xf32>
    %c2_40 = arith.constant 2 : index
    %c0_41 = arith.constant 0 : index
    %c0_42 = arith.constant 0 : index
    %57 = vector.load %arg4[%c2_40, %c0_41, %c0_42] : memref<4x1x128xf32, #tpu.memory_space<vmem>>, vector<1x1x128xf32>
    %58 = vector.shape_cast %57 : vector<1x1x128xf32> to vector<1x128xf32>
    %59 = vector.broadcast %58 : vector<1x128xf32> to vector<8x128xf32>
    %60 = arith.addf %56, %59 : vector<8x128xf32>
    %c3 = arith.constant 3 : index
    %c0_43 = arith.constant 0 : index
    %c0_44 = arith.constant 0 : index
    %61 = vector.load %arg1[%c3, %c0_43, %c0_44] : memref<4x128x128xf32, #tpu.memory_space<vmem>>, vector<1x128x128xf32>
    %62 = vector.shape_cast %61 : vector<1x128x128xf32> to vector<128x128xf32>
    %cst_45 = arith.constant dense<0.000000e+00> : vector<8x128xf32>
    %63 = tpu.matmul %60, %62, %cst_45 {dimension_numbers = #tpu.dot_dimension_numbers<[1], [0], [0], [1], [0, 0, 1, 1], [], []>} : vector<8x128xf32>, vector<128x128xf32>, vector<8x128xf32> -> vector<8x128xf32>
    %c3_46 = arith.constant 3 : index
    %c0_47 = arith.constant 0 : index
    %c0_48 = arith.constant 0 : index
    %64 = vector.load %arg2[%c3_46, %c0_47, %c0_48] : memref<4x1x128xf32, #tpu.memory_space<vmem>>, vector<1x1x128xf32>
    %65 = vector.shape_cast %64 : vector<1x1x128xf32> to vector<1x128xf32>
    %66 = vector.broadcast %65 : vector<1x128xf32> to vector<8x128xf32>
    %67 = arith.addf %63, %66 : vector<8x128xf32>
    %68 = arith.negf %67 : vector<8x128xf32>
    %69 = math.exp %68 : vector<8x128xf32>
    %cst_49 = arith.constant 1.000000e+00 : f32
    %70 = vector.broadcast %cst_49 : f32 to vector<8x128xf32>
    %71 = arith.addf %70, %69 : vector<8x128xf32>
    %72 = arith.divf %70, %71 : vector<8x128xf32>
    %73 = arith.mulf %67, %72 : vector<8x128xf32>
    %c3_50 = arith.constant 3 : index
    %c0_51 = arith.constant 0 : index
    %c0_52 = arith.constant 0 : index
    %74 = vector.load %arg3[%c3_50, %c0_51, %c0_52] : memref<4x128x128xf32, #tpu.memory_space<vmem>>, vector<1x128x128xf32>
    %75 = vector.shape_cast %74 : vector<1x128x128xf32> to vector<128x128xf32>
    %cst_53 = arith.constant dense<0.000000e+00> : vector<8x128xf32>
    %76 = tpu.matmul %73, %75, %cst_53 {dimension_numbers = #tpu.dot_dimension_numbers<[1], [0], [0], [1], [0, 0, 1, 1], [], []>} : vector<8x128xf32>, vector<128x128xf32>, vector<8x128xf32> -> vector<8x128xf32>
    %c3_54 = arith.constant 3 : index
    %c0_55 = arith.constant 0 : index
    %c0_56 = arith.constant 0 : index
    %77 = vector.load %arg4[%c3_54, %c0_55, %c0_56] : memref<4x1x128xf32, #tpu.memory_space<vmem>>, vector<1x1x128xf32>
    %78 = vector.shape_cast %77 : vector<1x1x128xf32> to vector<1x128xf32>
    %79 = vector.broadcast %78 : vector<1x128xf32> to vector<8x128xf32>
    %80 = arith.addf %76, %79 : vector<8x128xf32>
    %c0_57 = arith.constant 0 : index
    %c0_58 = arith.constant 0 : index
    %81 = vector.load %arg5[%c0_57, %c0_58] : memref<8x128xf32, #tpu.memory_space<vmem>>, vector<8x128xf32>
    tpu.vector_store %arg5[%c0_57, %c0_58], %80 {strides = array<i32>} : memref<8x128xf32, #tpu.memory_space<vmem>>, vector<8x128xf32>,
    return
  }
}

</mosaic_0001>

<llo_original>
// kernel: mamba_forward.1
$region0: #{mamba_forward.1}
  #allocation0 [shape = 'u32[]', space=smem, size = 0x4, offset = 0x4, fixed_abs, tag = 'smem constant byte address 0x4 - core index']
  #allocation1 [shape = 'u32[144,128]{1,0:T(1,128)}', space=vmem, size = 0x12000, scoped, tag = 'internal scratch']
  %s0 = inlined_call_operand.vmem [shape: f32[8,128], index: 0, kind: input, shape index: {}]
  %s1 = inlined_call_operand.vmem [shape: f32[4,128,128], index: 1, kind: input, shape index: {}]
  %s2 = inlined_call_operand.vmem [shape: f32[4,1,128], index: 2, kind: input, shape index: {}]
  %s3 = inlined_call_operand.vmem [shape: f32[4,128,128], index: 3, kind: input, shape index: {}]
  %s4 = inlined_call_operand.vmem [shape: f32[4,1,128], index: 4, kind: input, shape index: {}]
  %s5 = inlined_call_operand.hbm [shape: f32[8,128], index: 5, kind: output, shape index: {}]
  %s6 = sld [smem:[#allocation0]]
  $region30: #{mamba_forward.1} parent=0
    _
  %s8 = ssub.s32 1, %s6
  %s9 = scalar_select 0, %s8, %s6
  $region1: #{mamba_forward.1} parent=0
    #allocation2 [shape = 'u8[4096]{0}', space=vmem, size = 0x1000, scoped, tag = 'output window, operand 0, single buffered']
    #allocation3 [shape = 's32[1]{0}', space=sflag, size = 0x4, scoped, tag = 'scoped memory for mamba_forward.1']
    %10 = vsyncpa [#allocation3], 0
    // Predicated region
    $region2: #{mamba_forward.1} parent=1 // pred_check
      _
    $region3: #{mamba_forward.1} parent=1 // pred_check_branch
      %12 = sbr.rel (0) target = $region5
    $region4: #{mamba_forward.1} parent=1 // pred_region
      _
    $region5: #{mamba_forward.1} parent=1 // pred_fallthru
      _
    // Predicated region
    $region6: #{mamba_forward.1} parent=1 // pred_check
      _
    $region7: #{mamba_forward.1} parent=1 // pred_check_branch
      %14 = sbr.rel (0) target = $region9
    $region8: #{mamba_forward.1} parent=1 // pred_region
      _
    $region9: #{mamba_forward.1} parent=1 // pred_fallthru
      _
    // Predicated region
    $region10: #{mamba_forward.1} parent=1 // pred_check
      _
    $region11: #{mamba_forward.1} parent=1 // pred_check_branch
      %16 = sbr.rel (0) target = $region13
    $region12: #{mamba_forward.1} parent=1 // pred_region
      _
    $region13: #{mamba_forward.1} parent=1 // pred_fallthru
      _
    // Predicated region
    $region14: #{mamba_forward.1} parent=1 // pred_check
      _
    $region15: #{mamba_forward.1} parent=1 // pred_check_branch
      %18 = sbr.rel (0) target = $region17
    $region16: #{mamba_forward.1} parent=1 // pred_region
      _
    $region17: #{mamba_forward.1} parent=1 // pred_fallthru
      _
    // Predicated region
    $region18: #{mamba_forward.1} parent=1 // pred_check
      _
    $region19: #{mamba_forward.1} parent=1 // pred_check_branch
      %20 = sbr.rel (0) target = $region21
    $region20: #{mamba_forward.1} parent=1 // pred_region
      _
    $region21: #{mamba_forward.1} parent=1 // pred_fallthru
      _
    %v21 = vld [vmem:[%s0] sm:$0xff]
    %v22 = vld [vmem:[%s1] sm:$0xff]
    %v23 = vld [vmem:[%s1 + $0x8] sm:$0xff]
    %v24 = vld [vmem:[%s1 + $0x10] sm:$0xff]
    %v25 = vld [vmem:[%s1 + $0x18] sm:$0xff]
    %v26 = vld [vmem:[%s1 + $0x20] sm:$0xff]
    %v27 = vld [vmem:[%s1 + $0x28] sm:$0xff]
    %v28 = vld [vmem:[%s1 + $0x30] sm:$0xff]
    %v29 = vld [vmem:[%s1 + $0x38] sm:$0xff]
    %v30 = vld [vmem:[%s1 + $0x40] sm:$0xff]
    %v31 = vld [vmem:[%s1 + $0x48] sm:$0xff]
    %v32 = vld [vmem:[%s1 + $0x50] sm:$0xff]
    %v33 = vld [vmem:[%s1 + $0x58] sm:$0xff]
    %v34 = vld [vmem:[%s1 + $0x60] sm:$0xff]
    %v35 = vld [vmem:[%s1 + $0x68] sm:$0xff]
    %v36 = vld [vmem:[%s1 + $0x70] sm:$0xff]
    %v37 = vld [vmem:[%s1 + $0x78] sm:$0xff]
    %v38 = vld [vmem:[%s2] sm:$0x1]
    %v40 = vlaneseq
    %v41 = vshrl.u32 %v40, 7
    %v42 = vsub.s32 0, %v41
    %v43 = vrot.slane %v38, %v42
    %45 = vmatprep.subr.mxu0 0.0
    %46 = vmatpush1.msra.mxu0 %v37
    %47 = vmatprep.subr.mxu0 0.0
    %48 = vmatpush1.msra.mxu0 %v36
    %49 = vmatprep.subr.mxu0 0.0
    %50 = vmatpush1.msra.mxu0 %v35
    %51 = vmatprep.subr.mxu0 0.0
    %52 = vmatpush1.msra.mxu0 %v34
    %53 = vmatprep.subr.mxu0 0.0
    %54 = vmatpush1.msra.mxu0 %v33
    %55 = vmatprep.subr.mxu0 0.0
    %56 = vmatpush1.msra.mxu0 %v32
    %57 = vmatprep.subr.mxu0 0.0
    %58 = vmatpush1.msra.mxu0 %v31
    %59 = vmatprep.subr.mxu0 0.0
    %60 = vmatpush1.msra.mxu0 %v30
    %61 = vmatprep.subr.mxu0 0.0
    %62 = vmatpush1.msra.mxu0 %v29
    %63 = vmatprep.subr.mxu0 0.0
    %64 = vmatpush1.msra.mxu0 %v28
    %65 = vmatprep.subr.mxu0 0.0
    %66 = vmatpush1.msra.mxu0 %v27
    %67 = vmatprep.subr.mxu0 0.0
    %68 = vmatpush1.msra.mxu0 %v26
    %69 = vmatprep.subr.mxu0 0.0
    %70 = vmatpush1.msra.mxu0 %v25
    %71 = vmatprep.subr.mxu0 0.0
    %72 = vmatpush1.msra.mxu0 %v24
    %73 = vmatprep.subr.mxu0 0.0
    %74 = vmatpush1.msra.mxu0 %v23
    %75 = vmatprep.subr.mxu0 0.0
    %76 = vmatpush1.msra.mxu0 %v22
    %77 = vmatprep.subr.mxu0 0.0
    %78 = vmatpush2.msra.mxu0 0.0
    %79 = vmatprep.subr.mxu0 0.0
    %80 = vmatpush2.msra.mxu0 0.0
    %81 = vmatprep.subr.mxu0 0.0
    %82 = vmatpush2.msra.mxu0 0.0
    %83 = vmatprep.subr.mxu0 0.0
    %84 = vmatpush2.msra.mxu0 0.0
    %85 = vmatprep.subr.mxu0 0.0
    %86 = vmatpush2.msra.mxu0 0.0
    %87 = vmatprep.subr.mxu0 0.0
    %88 = vmatpush2.msra.mxu0 0.0
    %89 = vmatprep.subr.mxu0 0.0
    %90 = vmatpush2.msra.mxu0 0.0
    %91 = vmatprep.subr.mxu0 0.0
    %92 = vmatpush2.msra.mxu0 0.0
    %93 = vmatprep.subr.mxu0 0.0
    %94 = vmatpush2.msra.mxu0 0.0
    %95 = vmatprep.subr.mxu0 0.0
    %96 = vmatpush2.msra.mxu0 0.0
    %97 = vmatprep.subr.mxu0 0.0
    %98 = vmatpush2.msra.mxu0 0.0
    %99 = vmatprep.subr.mxu0 0.0
    %100 = vmatpush2.msra.mxu0 0.0
    %101 = vmatprep.subr.mxu0 0.0
    %102 = vmatpush2.msra.mxu0 0.0
    %103 = vmatprep.subr.mxu0 0.0
    %104 = vmatpush2.msra.mxu0 0.0
    %105 = vmatprep.subr.mxu0 0.0
    %106 = vmatpush2.msra.mxu0 0.0
    %107 = vmatprep.subr.mxu0 0.0
    %108 = vmatpush2.msra.mxu0 0.0
    %109 = vmatprep.mubr.f32.mxu0 0.0
    %110 = vmatmul.mubr.f32.gmra.mxu0 %v21
    %v111 = vpop.f32.mrf.mxu0
    %v112 = vadd.f32 %v43, %v111
    %v113 = vpop.f32.mrf.mxu0
    %114 = vdwg.mxu0
    %v115 = vxor.u32 %v112, 2147483648
    %v116 = vmul.f32 %v115, 1.442695
    %v117 = vpow.pop %v116
    %v118 = vadd.f32 %v117, 1.0
    %v119 = vrcp.pop %v118
    %v120 = vmul.f32 1.0, %v119
    %v121 = vmul.f32 %v112, %v120
    %v122 = vld [vmem:[%s3] sm:$0xff]
    %v123 = vld [vmem:[%s3 + $0x8] sm:$0xff]
    %v124 = vld [vmem:[%s3 + $0x10] sm:$0xff]
    %v125 = vld [vmem:[%s3 + $0x18] sm:$0xff]
    %v126 = vld [vmem:[%s3 + $0x20] sm:$0xff]
    %v127 = vld [vmem:[%s3 + $0x28] sm:$0xff]
    %v128 = vld [vmem:[%s3 + $0x30] sm:$0xff]
    %v129 = vld [vmem:[%s3 + $0x38] sm:$0xff]
    %v130 = vld [vmem:[%s3 + $0x40] sm:$0xff]
    %v131 = vld [vmem:[%s3 + $0x48] sm:$0xff]
    %v132 = vld [vmem:[%s3 + $0x50] sm:$0xff]
    %v133 = vld [vmem:[%s3 + $0x58] sm:$0xff]
    %v134 = vld [vmem:[%s3 + $0x60] sm:$0xff]
    %v135 = vld [vmem:[%s3 + $0x68] sm:$0xff]
    %v136 = vld [vmem:[%s3 + $0x70] sm:$0xff]
    %v137 = vld [vmem:[%s3 + $0x78] sm:$0xff]
    %v138 = vld [vmem:[%s4] sm:$0x1]
    %v140 = vlaneseq
    %v141 = vshrl.u32 %v140, 7
    %v142 = vsub.s32 0, %v141
    %v143 = vrot.slane %v138, %v142
    %145 = vmatprep.subr.mxu0 0.0
    %146 = vmatpush1.msra.mxu0 %v137
    %147 = vmatprep.subr.mxu0 0.0
    %148 = vmatpush1.msra.mxu0 %v136
    %149 = vmatprep.subr.mxu0 0.0
    %150 = vmatpush1.msra.mxu0 %v135
    %151 = vmatprep.subr.mxu0 0.0
    %152 = vmatpush1.msra.mxu0 %v134
    %153 = vmatprep.subr.mxu0 0.0
    %154 = vmatpush1.msra.mxu0 %v133
    %155 = vmatprep.subr.mxu0 0.0
    %156 = vmatpush1.msra.mxu0 %v132
    %157 = vmatprep.subr.mxu0 0.0
    %158 = vmatpush1.msra.mxu0 %v131
    %159 = vmatprep.subr.mxu0 0.0
    %160 = vmatpush1.msra.mxu0 %v130
    %161 = vmatprep.subr.mxu0 0.0
    %162 = vmatpush1.msra.mxu0 %v129
    %163 = vmatprep.subr.mxu0 0.0
    %164 = vmatpush1.msra.mxu0 %v128
    %165 = vmatprep.subr.mxu0 0.0
    %166 = vmatpush1.msra.mxu0 %v127
    %167 = vmatprep.subr.mxu0 0.0
    %168 = vmatpush1.msra.mxu0 %v126
    %169 = vmatprep.subr.mxu0 0.0
    %170 = vmatpush1.msra.mxu0 %v125
    %171 = vmatprep.subr.mxu0 0.0
    %172 = vmatpush1.msra.mxu0 %v124
    %173 = vmatprep.subr.mxu0 0.0
    %174 = vmatpush1.msra.mxu0 %v123
    %175 = vmatprep.subr.mxu0 0.0
    %176 = vmatpush1.msra.mxu0 %v122
    %177 = vmatprep.subr.mxu0 0.0
    %178 = vmatpush2.msra.mxu0 0.0
    %179 = vmatprep.subr.mxu0 0.0
    %180 = vmatpush2.msra.mxu0 0.0
    %181 = vmatprep.subr.mxu0 0.0
    %182 = vmatpush2.msra.mxu0 0.0
    %183 = vmatprep.subr.mxu0 0.0
    %184 = vmatpush2.msra.mxu0 0.0
    %185 = vmatprep.subr.mxu0 0.0
    %186 = vmatpush2.msra.mxu0 0.0
    %187 = vmatprep.subr.mxu0 0.0
    %188 = vmatpush2.msra.mxu0 0.0
    %189 = vmatprep.subr.mxu0 0.0
    %190 = vmatpush2.msra.mxu0 0.0
    %191 = vmatprep.subr.mxu0 0.0
    %192 = vmatpush2.msra.mxu0 0.0
    %193 = vmatprep.subr.mxu0 0.0
    %194 = vmatpush2.msra.mxu0 0.0
    %195 = vmatprep.subr.mxu0 0.0
    %196 = vmatpush2.msra.mxu0 0.0
    %197 = vmatprep.subr.mxu0 0.0
    %198 = vmatpush2.msra.mxu0 0.0
    %199 = vmatprep.subr.mxu0 0.0
    %200 = vmatpush2.msra.mxu0 0.0
    %201 = vmatprep.subr.mxu0 0.0
    %202 = vmatpush2.msra.mxu0 0.0
    %203 = vmatprep.subr.mxu0 0.0
    %204 = vmatpush2.msra.mxu0 0.0
    %205 = vmatprep.subr.mxu0 0.0
    %206 = vmatpush2.msra.mxu0 0.0
    %207 = vmatprep.subr.mxu0 0.0
    %208 = vmatpush2.msra.mxu0 0.0
    %209 = vmatprep.mubr.f32.mxu0 0.0
    %210 = vmatmul.mubr.f32.gmra.mxu0 %v121
    %v211 = vpop.f32.mrf.mxu0
    %v212 = vadd.f32 %v143, %v211
    %v213 = vpop.f32.mrf.mxu0
    %214 = vdwg.mxu0
    %s215 = scalar_lea.vmem %s1, 128
    %v216 = vld [vmem:[%s215] sm:$0xff]
    %v217 = vld [vmem:[%s215 + $0x8] sm:$0xff]
    %v218 = vld [vmem:[%s215 + $0x10] sm:$0xff]
    %v219 = vld [vmem:[%s215 + $0x18] sm:$0xff]
    %v220 = vld [vmem:[%s215 + $0x20] sm:$0xff]
    %v221 = vld [vmem:[%s215 + $0x28] sm:$0xff]
    %v222 = vld [vmem:[%s215 + $0x30] sm:$0xff]
    %v223 = vld [vmem:[%s215 + $0x38] sm:$0xff]
    %v224 = vld [vmem:[%s215 + $0x40] sm:$0xff]
    %v225 = vld [vmem:[%s215 + $0x48] sm:$0xff]
    %v226 = vld [vmem:[%s215 + $0x50] sm:$0xff]
    %v227 = vld [vmem:[%s215 + $0x58] sm:$0xff]
    %v228 = vld [vmem:[%s215 + $0x60] sm:$0xff]
    %v229 = vld [vmem:[%s215 + $0x68] sm:$0xff]
    %v230 = vld [vmem:[%s215 + $0x70] sm:$0xff]
    %v231 = vld [vmem:[%s215 + $0x78] sm:$0xff]
    %s232 = scalar_lea.vmem %s2, 1
    %v233 = vld [vmem:[%s232] sm:$0x1]
    %v235 = vlaneseq
    %v236 = vshrl.u32 %v235, 7
    %v237 = vsub.s32 0, %v236
    %v238 = vrot.slane %v233, %v237
    %240 = vmatprep.subr.mxu0 0.0
    %241 = vmatpush1.msra.mxu0 %v231
    %242 = vmatprep.subr.mxu0 0.0
    %243 = vmatpush1.msra.mxu0 %v230
    %244 = vmatprep.subr.mxu0 0.0
    %245 = vmatpush1.msra.mxu0 %v229
    %246 = vmatprep.subr.mxu0 0.0
    %247 = vmatpush1.msra.mxu0 %v228
    %248 = vmatprep.subr.mxu0 0.0
    %249 = vmatpush1.msra.mxu0 %v227
    %250 = vmatprep.subr.mxu0 0.0
    %251 = vmatpush1.msra.mxu0 %v226
    %252 = vmatprep.subr.mxu0 0.0
    %253 = vmatpush1.msra.mxu0 %v225
    %254 = vmatprep.subr.mxu0 0.0
    %255 = vmatpush1.msra.mxu0 %v224
    %256 = vmatprep.subr.mxu0 0.0
    %257 = vmatpush1.msra.mxu0 %v223
    %258 = vmatprep.subr.mxu0 0.0
    %259 = vmatpush1.msra.mxu0 %v222
    %260 = vmatprep.subr.mxu0 0.0
    %261 = vmatpush1.msra.mxu0 %v221
    %262 = vmatprep.subr.mxu0 0.0
    %263 = vmatpush1.msra.mxu0 %v220
    %264 = vmatprep.subr.mxu0 0.0
    %265 = vmatpush1.msra.mxu0 %v219
    %266 = vmatprep.subr.mxu0 0.0
    %267 = vmatpush1.msra.mxu0 %v218
    %268 = vmatprep.subr.mxu0 0.0
    %269 = vmatpush1.msra.mxu0 %v217
    %270 = vmatprep.subr.mxu0 0.0
    %271 = vmatpush1.msra.mxu0 %v216
    %272 = vmatprep.subr.mxu0 0.0
    %273 = vmatpush2.msra.mxu0 0.0
    %274 = vmatprep.subr.mxu0 0.0
    %275 = vmatpush2.msra.mxu0 0.0
    %276 = vmatprep.subr.mxu0 0.0
    %277 = vmatpush2.msra.mxu0 0.0
    %278 = vmatprep.subr.mxu0 0.0
    %279 = vmatpush2.msra.mxu0 0.0
    %280 = vmatprep.subr.mxu0 0.0
    %281 = vmatpush2.msra.mxu0 0.0
    %282 = vmatprep.subr.mxu0 0.0
    %283 = vmatpush2.msra.mxu0 0.0
    %284 = vmatprep.subr.mxu0 0.0
    %285 = vmatpush2.msra.mxu0 0.0
    %286 = vmatprep.subr.mxu0 0.0
    %287 = vmatpush2.msra.mxu0 0.0
    %288 = vmatprep.subr.mxu0 0.0
    %289 = vmatpush2.msra.mxu0 0.0
    %290 = vmatprep.subr.mxu0 0.0
    %291 = vmatpush2.msra.mxu0 0.0
    %292 = vmatprep.subr.mxu0 0.0
    %293 = vmatpush2.msra.mxu0 0.0
    %294 = vmatprep.subr.mxu0 0.0
    %295 = vmatpush2.msra.mxu0 0.0
    %296 = vmatprep.subr.mxu0 0.0
    %297 = vmatpush2.msra.mxu0 0.0
    %298 = vmatprep.subr.mxu0 0.0
    %299 = vmatpush2.msra.mxu0 0.0
    %300 = vmatprep.subr.mxu0 0.0
    %301 = vmatpush2.msra.mxu0 0.0
    %302 = vmatprep.subr.mxu0 0.0
    %303 = vmatpush2.msra.mxu0 0.0
    %304 = vmatprep.mubr.f32.mxu0 0.0
    %305 = vmatmul.mubr.f32.gmra.mxu0 %v212
    %v306 = vpop.f32.mrf.mxu0
    %v307 = vadd.f32 %v238, %v306
    %v308 = vpop.f32.mrf.mxu0
    %309 = vdwg.mxu0
    %v310 = vxor.u32 %v307, 2147483648
    %v311 = vmul.f32 %v310, 1.442695
    %v312 = vpow.pop %v311
    %v313 = vadd.f32 %v312, 1.0
    %v314 = vrcp.pop %v313
    %v315 = vmul.f32 1.0, %v314
    %v316 = vmul.f32 %v307, %v315
    %s317 = scalar_lea.vmem %s3, 128
    %v318 = vld [vmem:[%s317] sm:$0xff]
    %v319 = vld [vmem:[%s317 + $0x8] sm:$0xff]
    %v320 = vld [vmem:[%s317 + $0x10] sm:$0xff]
    %v321 = vld [vmem:[%s317 + $0x18] sm:$0xff]
    %v322 = vld [vmem:[%s317 + $0x20] sm:$0xff]
    %v323 = vld [vmem:[%s317 + $0x28] sm:$0xff]
    %v324 = vld [vmem:[%s317 + $0x30] sm:$0xff]
    %v325 = vld [vmem:[%s317 + $0x38] sm:$0xff]
    %v326 = vld [vmem:[%s317 + $0x40] sm:$0xff]
    %v327 = vld [vmem:[%s317 + $0x48] sm:$0xff]
    %v328 = vld [vmem:[%s317 + $0x50] sm:$0xff]
    %v329 = vld [vmem:[%s317 + $0x58] sm:$0xff]
    %v330 = vld [vmem:[%s317 + $0x60] sm:$0xff]
    %v331 = vld [vmem:[%s317 + $0x68] sm:$0xff]
    %v332 = vld [vmem:[%s317 + $0x70] sm:$0xff]
    %v333 = vld [vmem:[%s317 + $0x78] sm:$0xff]
    %s334 = scalar_lea.vmem %s4, 1
    %v335 = vld [vmem:[%s334] sm:$0x1]
    %v337 = vlaneseq
    %v338 = vshrl.u32 %v337, 7
    %v339 = vsub.s32 0, %v338
    %v340 = vrot.slane %v335, %v339
    %342 = vmatprep.subr.mxu0 0.0
    %343 = vmatpush1.msra.mxu0 %v333
    %344 = vmatprep.subr.mxu0 0.0
    %345 = vmatpush1.msra.mxu0 %v332
    %346 = vmatprep.subr.mxu0 0.0
    %347 = vmatpush1.msra.mxu0 %v331
    %348 = vmatprep.subr.mxu0 0.0
    %349 = vmatpush1.msra.mxu0 %v330
    %350 = vmatprep.subr.mxu0 0.0
    %351 = vmatpush1.msra.mxu0 %v329
    %352 = vmatprep.subr.mxu0 0.0
    %353 = vmatpush1.msra.mxu0 %v328
    %354 = vmatprep.subr.mxu0 0.0
    %355 = vmatpush1.msra.mxu0 %v327
    %356 = vmatprep.subr.mxu0 0.0
    %357 = vmatpush1.msra.mxu0 %v326
    %358 = vmatprep.subr.mxu0 0.0
    %359 = vmatpush1.msra.mxu0 %v325
    %360 = vmatprep.subr.mxu0 0.0
    %361 = vmatpush1.msra.mxu0 %v324
    %362 = vmatprep.subr.mxu0 0.0
    %363 = vmatpush1.msra.mxu0 %v323
    %364 = vmatprep.subr.mxu0 0.0
    %365 = vmatpush1.msra.mxu0 %v322
    %366 = vmatprep.subr.mxu0 0.0
    %367 = vmatpush1.msra.mxu0 %v321
    %368 = vmatprep.subr.mxu0 0.0
    %369 = vmatpush1.msra.mxu0 %v320
    %370 = vmatprep.subr.mxu0 0.0
    %371 = vmatpush1.msra.mxu0 %v319
    %372 = vmatprep.subr.mxu0 0.0
    %373 = vmatpush1.msra.mxu0 %v318
    %374 = vmatprep.subr.mxu0 0.0
    %375 = vmatpush2.msra.mxu0 0.0
    %376 = vmatprep.subr.mxu0 0.0
    %377 = vmatpush2.msra.mxu0 0.0
    %378 = vmatprep.subr.mxu0 0.0
    %379 = vmatpush2.msra.mxu0 0.0
    %380 = vmatprep.subr.mxu0 0.0
    %381 = vmatpush2.msra.mxu0 0.0
    %382 = vmatprep.subr.mxu0 0.0
    %383 = vmatpush2.msra.mxu0 0.0
    %384 = vmatprep.subr.mxu0 0.0
    %385 = vmatpush2.msra.mxu0 0.0
    %386 = vmatprep.subr.mxu0 0.0
    %387 = vmatpush2.msra.mxu0 0.0
    %388 = vmatprep.subr.mxu0 0.0
    %389 = vmatpush2.msra.mxu0 0.0
    %390 = vmatprep.subr.mxu0 0.0
    %391 = vmatpush2.msra.mxu0 0.0
    %392 = vmatprep.subr.mxu0 0.0
    %393 = vmatpush2.msra.mxu0 0.0
    %394 = vmatprep.subr.mxu0 0.0
    %395 = vmatpush2.msra.mxu0 0.0
    %396 = vmatprep.subr.mxu0 0.0
    %397 = vmatpush2.msra.mxu0 0.0
    %398 = vmatprep.subr.mxu0 0.0
    %399 = vmatpush2.msra.mxu0 0.0
    %400 = vmatprep.subr.mxu0 0.0
    %401 = vmatpush2.msra.mxu0 0.0
    %402 = vmatprep.subr.mxu0 0.0
    %403 = vmatpush2.msra.mxu0 0.0
    %404 = vmatprep.subr.mxu0 0.0
    %405 = vmatpush2.msra.mxu0 0.0
    %406 = vmatprep.mubr.f32.mxu0 0.0
    %407 = vmatmul.mubr.f32.gmra.mxu0 %v316
    %v408 = vpop.f32.mrf.mxu0
    %v409 = vadd.f32 %v340, %v408
    %v410 = vpop.f32.mrf.mxu0
    %411 = vdwg.mxu0
    %s412 = scalar_lea.vmem %s1, 256
    %v413 = vld [vmem:[%s412] sm:$0xff]
    %v414 = vld [vmem:[%s412 + $0x8] sm:$0xff]
    %v415 = vld [vmem:[%s412 + $0x10] sm:$0xff]
    %v416 = vld [vmem:[%s412 + $0x18] sm:$0xff]
    %v417 = vld [vmem:[%s412 + $0x20] sm:$0xff]
    %v418 = vld [vmem:[%s412 + $0x28] sm:$0xff]
    %v419 = vld [vmem:[%s412 + $0x30] sm:$0xff]
    %v420 = vld [vmem:[%s412 + $0x38] sm:$0xff]
    %v421 = vld [vmem:[%s412 + $0x40] sm:$0xff]
    %v422 = vld [vmem:[%s412 + $0x48] sm:$0xff]
    %v423 = vld [vmem:[%s412 + $0x50] sm:$0xff]
    %v424 = vld [vmem:[%s412 + $0x58] sm:$0xff]
    %v425 = vld [vmem:[%s412 + $0x60] sm:$0xff]
    %v426 = vld [vmem:[%s412 + $0x68] sm:$0xff]
    %v427 = vld [vmem:[%s412 + $0x70] sm:$0xff]
    %v428 = vld [vmem:[%s412 + $0x78] sm:$0xff]
    %s429 = scalar_lea.vmem %s2, 2
    %v430 = vld [vmem:[%s429] sm:$0x1]
    %v432 = vlaneseq
    %v433 = vshrl.u32 %v432, 7
    %v434 = vsub.s32 0, %v433
    %v435 = vrot.slane %v430, %v434
    %437 = vmatprep.subr.mxu0 0.0
    %438 = vmatpush1.msra.mxu0 %v428
    %439 = vmatprep.subr.mxu0 0.0
    %440 = vmatpush1.msra.mxu0 %v427
    %441 = vmatprep.subr.mxu0 0.0
    %442 = vmatpush1.msra.mxu0 %v426
    %443 = vmatprep.subr.mxu0 0.0
    %444 = vmatpush1.msra.mxu0 %v425
    %445 = vmatprep.subr.mxu0 0.0
    %446 = vmatpush1.msra.mxu0 %v424
    %447 = vmatprep.subr.mxu0 0.0
    %448 = vmatpush1.msra.mxu0 %v423
    %449 = vmatprep.subr.mxu0 0.0
    %450 = vmatpush1.msra.mxu0 %v422
    %451 = vmatprep.subr.mxu0 0.0
    %452 = vmatpush1.msra.mxu0 %v421
    %453 = vmatprep.subr.mxu0 0.0
    %454 = vmatpush1.msra.mxu0 %v420
    %455 = vmatprep.subr.mxu0 0.0
    %456 = vmatpush1.msra.mxu0 %v419
    %457 = vmatprep.subr.mxu0 0.0
    %458 = vmatpush1.msra.mxu0 %v418
    %459 = vmatprep.subr.mxu0 0.0
    %460 = vmatpush1.msra.mxu0 %v417
    %461 = vmatprep.subr.mxu0 0.0
    %462 = vmatpush1.msra.mxu0 %v416
    %463 = vmatprep.subr.mxu0 0.0
    %464 = vmatpush1.msra.mxu0 %v415
    %465 = vmatprep.subr.mxu0 0.0
    %466 = vmatpush1.msra.mxu0 %v414
    %467 = vmatprep.subr.mxu0 0.0
    %468 = vmatpush1.msra.mxu0 %v413
    %469 = vmatprep.subr.mxu0 0.0
    %470 = vmatpush2.msra.mxu0 0.0
    %471 = vmatprep.subr.mxu0 0.0
    %472 = vmatpush2.msra.mxu0 0.0
    %473 = vmatprep.subr.mxu0 0.0
    %474 = vmatpush2.msra.mxu0 0.0
    %475 = vmatprep.subr.mxu0 0.0
    %476 = vmatpush2.msra.mxu0 0.0
    %477 = vmatprep.subr.mxu0 0.0
    %478 = vmatpush2.msra.mxu0 0.0
    %479 = vmatprep.subr.mxu0 0.0
    %480 = vmatpush2.msra.mxu0 0.0
    %481 = vmatprep.subr.mxu0 0.0
    %482 = vmatpush2.msra.mxu0 0.0
    %483 = vmatprep.subr.mxu0 0.0
    %484 = vmatpush2.msra.mxu0 0.0
    %485 = vmatprep.subr.mxu0 0.0
    %486 = vmatpush2.msra.mxu0 0.0
    %487 = vmatprep.subr.mxu0 0.0
    %488 = vmatpush2.msra.mxu0 0.0
    %489 = vmatprep.subr.mxu0 0.0
    %490 = vmatpush2.msra.mxu0 0.0
    %491 = vmatprep.subr.mxu0 0.0
    %492 = vmatpush2.msra.mxu0 0.0
    %493 = vmatprep.subr.mxu0 0.0
    %494 = vmatpush2.msra.mxu0 0.0
    %495 = vmatprep.subr.mxu0 0.0
    %496 = vmatpush2.msra.mxu0 0.0
    %497 = vmatprep.subr.mxu0 0.0
    %498 = vmatpush2.msra.mxu0 0.0
    %499 = vmatprep.subr.mxu0 0.0
    %500 = vmatpush2.msra.mxu0 0.0
    %501 = vmatprep.mubr.f32.mxu0 0.0
    %502 = vmatmul.mubr.f32.gmra.mxu0 %v409
    %v503 = vpop.f32.mrf.mxu0
    %v504 = vadd.f32 %v435, %v503
    %v505 = vpop.f32.mrf.mxu0
    %506 = vdwg.mxu0
    %v507 = vxor.u32 %v504, 2147483648
    %v508 = vmul.f32 %v507, 1.442695
    %v509 = vpow.pop %v508
    %v510 = vadd.f32 %v509, 1.0
    %v511 = vrcp.pop %v510
    %v512 = vmul.f32 1.0, %v511
    %v513 = vmul.f32 %v504, %v512
    %s514 = scalar_lea.vmem %s3, 256
    %v515 = vld [vmem:[%s514] sm:$0xff]
    %v516 = vld [vmem:[%s514 + $0x8] sm:$0xff]
    %v517 = vld [vmem:[%s514 + $0x10] sm:$0xff]
    %v518 = vld [vmem:[%s514 + $0x18] sm:$0xff]
    %v519 = vld [vmem:[%s514 + $0x20] sm:$0xff]
    %v520 = vld [vmem:[%s514 + $0x28] sm:$0xff]
    %v521 = vld [vmem:[%s514 + $0x30] sm:$0xff]
    %v522 = vld [vmem:[%s514 + $0x38] sm:$0xff]
    %v523 = vld [vmem:[%s514 + $0x40] sm:$0xff]
    %v524 = vld [vmem:[%s514 + $0x48] sm:$0xff]
    %v525 = vld [vmem:[%s514 + $0x50] sm:$0xff]
    %v526 = vld [vmem:[%s514 + $0x58] sm:$0xff]
    %v527 = vld [vmem:[%s514 + $0x60] sm:$0xff]
    %v528 = vld [vmem:[%s514 + $0x68] sm:$0xff]
    %v529 = vld [vmem:[%s514 + $0x70] sm:$0xff]
    %v530 = vld [vmem:[%s514 + $0x78] sm:$0xff]
    %s531 = scalar_lea.vmem %s4, 2
    %v532 = vld [vmem:[%s531] sm:$0x1]
    %v534 = vlaneseq
    %v535 = vshrl.u32 %v534, 7
    %v536 = vsub.s32 0, %v535
    %v537 = vrot.slane %v532, %v536
    %539 = vmatprep.subr.mxu0 0.0
    %540 = vmatpush1.msra.mxu0 %v530
    %541 = vmatprep.subr.mxu0 0.0
    %542 = vmatpush1.msra.mxu0 %v529
    %543 = vmatprep.subr.mxu0 0.0
    %544 = vmatpush1.msra.mxu0 %v528
    %545 = vmatprep.subr.mxu0 0.0
    %546 = vmatpush1.msra.mxu0 %v527
    %547 = vmatprep.subr.mxu0 0.0
    %548 = vmatpush1.msra.mxu0 %v526
    %549 = vmatprep.subr.mxu0 0.0
    %550 = vmatpush1.msra.mxu0 %v525
    %551 = vmatprep.subr.mxu0 0.0
    %552 = vmatpush1.msra.mxu0 %v524
    %553 = vmatprep.subr.mxu0 0.0
    %554 = vmatpush1.msra.mxu0 %v523
    %555 = vmatprep.subr.mxu0 0.0
    %556 = vmatpush1.msra.mxu0 %v522
    %557 = vmatprep.subr.mxu0 0.0
    %558 = vmatpush1.msra.mxu0 %v521
    %559 = vmatprep.subr.mxu0 0.0
    %560 = vmatpush1.msra.mxu0 %v520
    %561 = vmatprep.subr.mxu0 0.0
    %562 = vmatpush1.msra.mxu0 %v519
    %563 = vmatprep.subr.mxu0 0.0
    %564 = vmatpush1.msra.mxu0 %v518
    %565 = vmatprep.subr.mxu0 0.0
    %566 = vmatpush1.msra.mxu0 %v517
    %567 = vmatprep.subr.mxu0 0.0
    %568 = vmatpush1.msra.mxu0 %v516
    %569 = vmatprep.subr.mxu0 0.0
    %570 = vmatpush1.msra.mxu0 %v515
    %571 = vmatprep.subr.mxu0 0.0
    %572 = vmatpush2.msra.mxu0 0.0
    %573 = vmatprep.subr.mxu0 0.0
    %574 = vmatpush2.msra.mxu0 0.0
    %575 = vmatprep.subr.mxu0 0.0
    %576 = vmatpush2.msra.mxu0 0.0
    %577 = vmatprep.subr.mxu0 0.0
    %578 = vmatpush2.msra.mxu0 0.0
    %579 = vmatprep.subr.mxu0 0.0
    %580 = vmatpush2.msra.mxu0 0.0
    %581 = vmatprep.subr.mxu0 0.0
    %582 = vmatpush2.msra.mxu0 0.0
    %583 = vmatprep.subr.mxu0 0.0
    %584 = vmatpush2.msra.mxu0 0.0
    %585 = vmatprep.subr.mxu0 0.0
    %586 = vmatpush2.msra.mxu0 0.0
    %587 = vmatprep.subr.mxu0 0.0
    %588 = vmatpush2.msra.mxu0 0.0
    %589 = vmatprep.subr.mxu0 0.0
    %590 = vmatpush2.msra.mxu0 0.0
    %591 = vmatprep.subr.mxu0 0.0
    %592 = vmatpush2.msra.mxu0 0.0
    %593 = vmatprep.subr.mxu0 0.0
    %594 = vmatpush2.msra.mxu0 0.0
    %595 = vmatprep.subr.mxu0 0.0
    %596 = vmatpush2.msra.mxu0 0.0
    %597 = vmatprep.subr.mxu0 0.0
    %598 = vmatpush2.msra.mxu0 0.0
    %599 = vmatprep.subr.mxu0 0.0
    %600 = vmatpush2.msra.mxu0 0.0
    %601 = vmatprep.subr.mxu0 0.0
    %602 = vmatpush2.msra.mxu0 0.0
    %603 = vmatprep.mubr.f32.mxu0 0.0
    %604 = vmatmul.mubr.f32.gmra.mxu0 %v513
    %v605 = vpop.f32.mrf.mxu0
    %v606 = vadd.f32 %v537, %v605
    %v607 = vpop.f32.mrf.mxu0
    %608 = vdwg.mxu0
    %s609 = scalar_lea.vmem %s1, 384
    %v610 = vld [vmem:[%s609] sm:$0xff]
    %v611 = vld [vmem:[%s609 + $0x8] sm:$0xff]
    %v612 = vld [vmem:[%s609 + $0x10] sm:$0xff]
    %v613 = vld [vmem:[%s609 + $0x18] sm:$0xff]
    %v614 = vld [vmem:[%s609 + $0x20] sm:$0xff]
    %v615 = vld [vmem:[%s609 + $0x28] sm:$0xff]
    %v616 = vld [vmem:[%s609 + $0x30] sm:$0xff]
    %v617 = vld [vmem:[%s609 + $0x38] sm:$0xff]
    %v618 = vld [vmem:[%s609 + $0x40] sm:$0xff]
    %v619 = vld [vmem:[%s609 + $0x48] sm:$0xff]
    %v620 = vld [vmem:[%s609 + $0x50] sm:$0xff]
    %v621 = vld [vmem:[%s609 + $0x58] sm:$0xff]
    %v622 = vld [vmem:[%s609 + $0x60] sm:$0xff]
    %v623 = vld [vmem:[%s609 + $0x68] sm:$0xff]
    %v624 = vld [vmem:[%s609 + $0x70] sm:$0xff]
    %v625 = vld [vmem:[%s609 + $0x78] sm:$0xff]
    %s626 = scalar_lea.vmem %s2, 3
    %v627 = vld [vmem:[%s626] sm:$0x1]
    %v629 = vlaneseq
    %v630 = vshrl.u32 %v629, 7
    %v631 = vsub.s32 0, %v630
    %v632 = vrot.slane %v627, %v631
    %634 = vmatprep.subr.mxu0 0.0
    %635 = vmatpush1.msra.mxu0 %v625
    %636 = vmatprep.subr.mxu0 0.0
    %637 = vmatpush1.msra.mxu0 %v624
    %638 = vmatprep.subr.mxu0 0.0
    %639 = vmatpush1.msra.mxu0 %v623
    %640 = vmatprep.subr.mxu0 0.0
    %641 = vmatpush1.msra.mxu0 %v622
    %642 = vmatprep.subr.mxu0 0.0
    %643 = vmatpush1.msra.mxu0 %v621
    %644 = vmatprep.subr.mxu0 0.0
    %645 = vmatpush1.msra.mxu0 %v620
    %646 = vmatprep.subr.mxu0 0.0
    %647 = vmatpush1.msra.mxu0 %v619
    %648 = vmatprep.subr.mxu0 0.0
    %649 = vmatpush1.msra.mxu0 %v618
    %650 = vmatprep.subr.mxu0 0.0
    %651 = vmatpush1.msra.mxu0 %v617
    %652 = vmatprep.subr.mxu0 0.0
    %653 = vmatpush1.msra.mxu0 %v616
    %654 = vmatprep.subr.mxu0 0.0
    %655 = vmatpush1.msra.mxu0 %v615
    %656 = vmatprep.subr.mxu0 0.0
    %657 = vmatpush1.msra.mxu0 %v614
    %658 = vmatprep.subr.mxu0 0.0
    %659 = vmatpush1.msra.mxu0 %v613
    %660 = vmatprep.subr.mxu0 0.0
    %661 = vmatpush1.msra.mxu0 %v612
    %662 = vmatprep.subr.mxu0 0.0
    %663 = vmatpush1.msra.mxu0 %v611
    %664 = vmatprep.subr.mxu0 0.0
    %665 = vmatpush1.msra.mxu0 %v610
    %666 = vmatprep.subr.mxu0 0.0
    %667 = vmatpush2.msra.mxu0 0.0
    %668 = vmatprep.subr.mxu0 0.0
    %669 = vmatpush2.msra.mxu0 0.0
    %670 = vmatprep.subr.mxu0 0.0
    %671 = vmatpush2.msra.mxu0 0.0
    %672 = vmatprep.subr.mxu0 0.0
    %673 = vmatpush2.msra.mxu0 0.0
    %674 = vmatprep.subr.mxu0 0.0
    %675 = vmatpush2.msra.mxu0 0.0
    %676 = vmatprep.subr.mxu0 0.0
    %677 = vmatpush2.msra.mxu0 0.0
    %678 = vmatprep.subr.mxu0 0.0
    %679 = vmatpush2.msra.mxu0 0.0
    %680 = vmatprep.subr.mxu0 0.0
    %681 = vmatpush2.msra.mxu0 0.0
    %682 = vmatprep.subr.mxu0 0.0
    %683 = vmatpush2.msra.mxu0 0.0
    %684 = vmatprep.subr.mxu0 0.0
    %685 = vmatpush2.msra.mxu0 0.0
    %686 = vmatprep.subr.mxu0 0.0
    %687 = vmatpush2.msra.mxu0 0.0
    %688 = vmatprep.subr.mxu0 0.0
    %689 = vmatpush2.msra.mxu0 0.0
    %690 = vmatprep.subr.mxu0 0.0
    %691 = vmatpush2.msra.mxu0 0.0
    %692 = vmatprep.subr.mxu0 0.0
    %693 = vmatpush2.msra.mxu0 0.0
    %694 = vmatprep.subr.mxu0 0.0
    %695 = vmatpush2.msra.mxu0 0.0
    %696 = vmatprep.subr.mxu0 0.0
    %697 = vmatpush2.msra.mxu0 0.0
    %698 = vmatprep.mubr.f32.mxu0 0.0
    %699 = vmatmul.mubr.f32.gmra.mxu0 %v606
    %v700 = vpop.f32.mrf.mxu0
    %v701 = vadd.f32 %v632, %v700
    %v702 = vpop.f32.mrf.mxu0
    %703 = vdwg.mxu0
    %v704 = vxor.u32 %v701, 2147483648
    %v705 = vmul.f32 %v704, 1.442695
    %v706 = vpow.pop %v705
    %v707 = vadd.f32 %v706, 1.0
    %v708 = vrcp.pop %v707
    %v709 = vmul.f32 1.0, %v708
    %v710 = vmul.f32 %v701, %v709
    %s711 = scalar_lea.vmem %s3, 384
    %v712 = vld [vmem:[%s711] sm:$0xff]
    %v713 = vld [vmem:[%s711 + $0x8] sm:$0xff]
    %v714 = vld [vmem:[%s711 + $0x10] sm:$0xff]
    %v715 = vld [vmem:[%s711 + $0x18] sm:$0xff]
    %v716 = vld [vmem:[%s711 + $0x20] sm:$0xff]
    %v717 = vld [vmem:[%s711 + $0x28] sm:$0xff]
    %v718 = vld [vmem:[%s711 + $0x30] sm:$0xff]
    %v719 = vld [vmem:[%s711 + $0x38] sm:$0xff]
    %v720 = vld [vmem:[%s711 + $0x40] sm:$0xff]
    %v721 = vld [vmem:[%s711 + $0x48] sm:$0xff]
    %v722 = vld [vmem:[%s711 + $0x50] sm:$0xff]
    %v723 = vld [vmem:[%s711 + $0x58] sm:$0xff]
    %v724 = vld [vmem:[%s711 + $0x60] sm:$0xff]
    %v725 = vld [vmem:[%s711 + $0x68] sm:$0xff]
    %v726 = vld [vmem:[%s711 + $0x70] sm:$0xff]
    %v727 = vld [vmem:[%s711 + $0x78] sm:$0xff]
    %s728 = scalar_lea.vmem %s4, 3
    %v729 = vld [vmem:[%s728] sm:$0x1]
    %v731 = vlaneseq
    %v732 = vshrl.u32 %v731, 7
    %v733 = vsub.s32 0, %v732
    %v734 = vrot.slane %v729, %v733
    %736 = vmatprep.subr.mxu0 0.0
    %737 = vmatpush1.msra.mxu0 %v727
    %738 = vmatprep.subr.mxu0 0.0
    %739 = vmatpush1.msra.mxu0 %v726
    %740 = vmatprep.subr.mxu0 0.0
    %741 = vmatpush1.msra.mxu0 %v725
    %742 = vmatprep.subr.mxu0 0.0
    %743 = vmatpush1.msra.mxu0 %v724
    %744 = vmatprep.subr.mxu0 0.0
    %745 = vmatpush1.msra.mxu0 %v723
    %746 = vmatprep.subr.mxu0 0.0
    %747 = vmatpush1.msra.mxu0 %v722
    %748 = vmatprep.subr.mxu0 0.0
    %749 = vmatpush1.msra.mxu0 %v721
    %750 = vmatprep.subr.mxu0 0.0
    %751 = vmatpush1.msra.mxu0 %v720
    %752 = vmatprep.subr.mxu0 0.0
    %753 = vmatpush1.msra.mxu0 %v719
    %754 = vmatprep.subr.mxu0 0.0
    %755 = vmatpush1.msra.mxu0 %v718
    %756 = vmatprep.subr.mxu0 0.0
    %757 = vmatpush1.msra.mxu0 %v717
    %758 = vmatprep.subr.mxu0 0.0
    %759 = vmatpush1.msra.mxu0 %v716
    %760 = vmatprep.subr.mxu0 0.0
    %761 = vmatpush1.msra.mxu0 %v715
    %762 = vmatprep.subr.mxu0 0.0
    %763 = vmatpush1.msra.mxu0 %v714
    %764 = vmatprep.subr.mxu0 0.0
    %765 = vmatpush1.msra.mxu0 %v713
    %766 = vmatprep.subr.mxu0 0.0
    %767 = vmatpush1.msra.mxu0 %v712
    %768 = vmatprep.subr.mxu0 0.0
    %769 = vmatpush2.msra.mxu0 0.0
    %770 = vmatprep.subr.mxu0 0.0
    %771 = vmatpush2.msra.mxu0 0.0
    %772 = vmatprep.subr.mxu0 0.0
    %773 = vmatpush2.msra.mxu0 0.0
    %774 = vmatprep.subr.mxu0 0.0
    %775 = vmatpush2.msra.mxu0 0.0
    %776 = vmatprep.subr.mxu0 0.0
    %777 = vmatpush2.msra.mxu0 0.0
    %778 = vmatprep.subr.mxu0 0.0
    %779 = vmatpush2.msra.mxu0 0.0
    %780 = vmatprep.subr.mxu0 0.0
    %781 = vmatpush2.msra.mxu0 0.0
    %782 = vmatprep.subr.mxu0 0.0
    %783 = vmatpush2.msra.mxu0 0.0
    %784 = vmatprep.subr.mxu0 0.0
    %785 = vmatpush2.msra.mxu0 0.0
    %786 = vmatprep.subr.mxu0 0.0
    %787 = vmatpush2.msra.mxu0 0.0
    %788 = vmatprep.subr.mxu0 0.0
    %789 = vmatpush2.msra.mxu0 0.0
    %790 = vmatprep.subr.mxu0 0.0
    %791 = vmatpush2.msra.mxu0 0.0
    %792 = vmatprep.subr.mxu0 0.0
    %793 = vmatpush2.msra.mxu0 0.0
    %794 = vmatprep.subr.mxu0 0.0
    %795 = vmatpush2.msra.mxu0 0.0
    %796 = vmatprep.subr.mxu0 0.0
    %797 = vmatpush2.msra.mxu0 0.0
    %798 = vmatprep.subr.mxu0 0.0
    %799 = vmatpush2.msra.mxu0 0.0
    %800 = vmatprep.mubr.f32.mxu0 0.0
    %801 = vmatmul.mubr.f32.gmra.mxu0 %v710
    %v802 = vpop.f32.mrf.mxu0
    %v803 = vadd.f32 %v734, %v802
    %v804 = vpop.f32.mrf.mxu0
    %805 = vdwg.mxu0
    %806 = vst [vmem:[#allocation2] sm:$0xff] %v803
    // Predicated region
    $region22: #{mamba_forward.1} parent=1 // pred_check
      _
    $region23: #{mamba_forward.1} parent=1 // pred_check_branch
      %808 = sbr.rel (0) target = $region25
    $region24: #{mamba_forward.1} parent=1 // pred_region
      %s810 = ssub.s32 128, 128
      %811 = vsyncadd [#allocation3], %s810
      %s813 = sshll.u32 [#allocation2], 4
      %s814 = int_to_ptr.vmem [resolvable:$true] %s813
      %816 = dma.vmem_to_hbm [thread:$0]  %s814, 128, %s5, [#allocation3]
    $region25: #{mamba_forward.1} parent=1 // pred_fallthru
      _
    // Predicated region
    $region26: #{mamba_forward.1} parent=1 // pred_check
      _
    $region27: #{mamba_forward.1} parent=1 // pred_check_branch
      %818 = sbr.rel (0) target = $region29
    $region28: #{mamba_forward.1} parent=1 // pred_region
      %819 = dma.done [#allocation3], 128
    $region29: #{mamba_forward.1} parent=1 // pred_fallthru
      _
    %820 = vsyncpa [#allocation3], 1

</llo_original>
